<compile_context>
chip_gen: v7x
topology: tpu7x:2x2x1
jax: 0.10.0
libtpu: 0.0.40
codegen_flags: <defaults>
</compile_context>

<pallas_src>
import functools

import jax
import jax.numpy as jnp
from jax.experimental import pallas as pl
from jax.experimental.pallas import tpu as pltpu

NUM_CLASSES = 5
C_PAD = 128          # lane-dense class dim (multiple of 128 lanes)
MAX_TILE_B = 256     # rows per batch tile: multiple of 8 (f32 sublane); sized so
                     # double-buffered x tiles + resident padded W stay well under
                     # the 32 MiB default-scoped VMEM on v7x (64 MiB physical).


def _round_up(n, m):
    return (n + m - 1) // m * m


def _pick_tile_b(batch):
    return min(MAX_TILE_B, _round_up(batch, 8))


def _pad_params(w, b):
    """Zero-pad the class dim of W [H,5] and b [1,5] to C_PAD lanes."""
    h = w.shape[0]
    w_pad = jnp.zeros((h, C_PAD), jnp.float32).at[:, :NUM_CLASSES].set(
        w.astype(jnp.float32))
    b_pad = jnp.zeros((1, C_PAD), jnp.float32).at[:, :NUM_CLASSES].set(
        b.reshape(1, -1).astype(jnp.float32))
    return w_pad, b_pad


def _pad_rows(a, rows):
    if a.shape[0] == rows:
        return a
    return jnp.zeros((rows,) + a.shape[1:], a.dtype).at[:a.shape[0]].set(a)


# ------------------------- Pallas kernels -------------------------

def _linear_kernel(x_ref, w_ref, b_ref, o_ref):
    # o = x @ W_pad + b_pad  — (tile_b, 128) output => unmasked lane-dense stores.
    o_ref[...] = (
        jnp.dot(x_ref[...], w_ref[...], preferred_element_type=jnp.float32)
        + b_ref[...]
    )


def _fused_linear_ce_kernel(x_ref, w_ref, b_ref, y_ref, loss_ref, acc_ref,
                            *, n_valid, tile_b):
    """Fused linear + cross-entropy (mean, int targets). Logits stay in vregs."""
    i = pl.program_id(0)

    # ---- linear (MXU) ----
    logits = (
        jnp.dot(x_ref[...], w_ref[...], preferred_element_type=jnp.float32)
        + b_ref[...]
    )                                                       # (tile_b, C_PAD)

    # Kill zero-padded class columns so they don't affect the softmax.
    col = jax.lax.broadcasted_iota(jnp.int32, logits.shape, 1)
    logits = jnp.where(col < NUM_CLASSES, logits, jnp.float32(-1e30))

    # ---- cross-entropy with integer targets ----
    m = jnp.max(logits, axis=-1, keepdims=True)             # (tile_b, 1)
    z = logits - m
    lse = jnp.log(jnp.sum(jnp.exp(z), axis=-1, keepdims=True))
    onehot = (col == y_ref[...]).astype(jnp.float32)        # (tile_b, C_PAD)
    correct = jnp.sum(z * onehot, axis=-1, keepdims=True)   # (tile_b, 1)
    nll = lse - correct                                     # (tile_b, 1)

    # Mask batch-padding rows of the (possibly ragged) last tile.
    row = i * tile_b + jax.lax.broadcasted_iota(jnp.int32, (tile_b, 1), 0)
    nll = jnp.where(row < n_valid, nll, 0.0)
    partial = jnp.sum(nll, axis=0, keepdims=True)           # (1, 1)

    @pl.when(i == 0)
    def _():
        acc_ref[...] = jnp.zeros_like(acc_ref)

    acc_ref[...] += partial

    @pl.when(i == pl.num_programs(0) - 1)
    def _():
        # Mean over the TRUE batch size (n_valid), not padded rows.
        loss_ref[...] = acc_ref[...] * jnp.float32(1.0 / n_valid)


# ------------------------- Wrappers -------------------------

def linear_forward(x, w, b):
    """Inference path: logits [B, NUM_CLASSES]."""
    batch, hidden = x.shape
    w_pad, b_pad = _pad_params(w, b)
    tb = _pick_tile_b(batch)
    rows = _round_up(batch, tb)
    x_pad = _pad_rows(x.astype(jnp.float32), rows)

    out = pl.pallas_call(
        _linear_kernel,
        out_shape=jax.ShapeDtypeStruct((rows, C_PAD), jnp.float32),
        grid=(rows // tb,),
        in_specs=[
            pl.BlockSpec((tb, hidden), lambda i: (i, 0)),      # x tile
            pl.BlockSpec((hidden, C_PAD), lambda i: (0, 0)),   # W (replicated)
            pl.BlockSpec((1, C_PAD), lambda i: (0, 0)),        # bias (replicated)
        ],
        out_specs=pl.BlockSpec((tb, C_PAD), lambda i: (i, 0)),
        compiler_params=pltpu.CompilerParams(
            dimension_semantics=("parallel",)),                # 2 TCs on v7x
    )(x_pad, w_pad, b_pad)
    return out[:batch, :NUM_CLASSES]


def fused_linear_ce_loss(x, w, b, y):
    """Training path: single fused kernel -> scalar mean cross-entropy loss."""
    batch, hidden = x.shape
    w_pad, b_pad = _pad_params(w, b)
    tb = _pick_tile_b(batch)
    rows = _round_up(batch, tb)
    x_pad = _pad_rows(x.astype(jnp.float32), rows)
    y_pad = _pad_rows(y.astype(jnp.int32).reshape(-1, 1), rows)

    kernel = functools.partial(_fused_linear_ce_kernel,
                               n_valid=batch, tile_b=tb)
    loss = pl.pallas_call(
        kernel,
        out_shape=jax.ShapeDtypeStruct((1, 1), jnp.float32),
        grid=(rows // tb,),
        in_specs=[
            pl.BlockSpec((tb, hidden), lambda i: (i, 0)),      # x tile
            pl.BlockSpec((hidden, C_PAD), lambda i: (0, 0)),   # W (resident)
            pl.BlockSpec((1, C_PAD), lambda i: (0, 0)),        # bias (resident)
            pl.BlockSpec((tb, 1), lambda i: (i, 0)),           # y tile
        ],
        # Same output block every step => resident accumulator, 1 writeback.
        out_specs=pl.BlockSpec((1, 1), lambda i: (0, 0)),
        scratch_shapes=[pltpu.VMEM((1, 1), jnp.float32)],      # NLL partial sum
        compiler_params=pltpu.CompilerParams(
            dimension_semantics=("arbitrary",)),               # reduction axis
    )(x_pad, w_pad, b_pad, y_pad)
    return loss[0, 0]


def torch_model_forward(x, w, b, y=None):
    """Equivalent of TorchModel.forward: logits if y is None, else CE loss."""
    if y is None:
        return linear_forward(x, w, b)
    return fused_linear_ce_loss(x, w, b, y)


# ------------------------- Main -------------------------

if __name__ == "__main__":
    hidden_size = 32
    batch = 8

    key = jax.random.PRNGKey(0)
    kx, kw, kb, ky = jax.random.split(key, 4)

    # Deterministic parameter init (PyTorch-Linear-style uniform bounds).
    bound = 1.0 / (hidden_size ** 0.5)
    w = jax.random.uniform(kw, (hidden_size, NUM_CLASSES), jnp.float32,
                           minval=-bound, maxval=bound)
    b = jax.random.uniform(kb, (1, NUM_CLASSES), jnp.float32,
                           minval=-bound, maxval=bound)
    x = jax.random.normal(kx, (batch, hidden_size), jnp.float32)
    y = jax.random.randint(ky, (batch,), 0, NUM_CLASSES, jnp.int32)

    logits_fn = jax.jit(lambda x, w, b: torch_model_forward(x, w, b))
    loss_fn = jax.jit(lambda x, w, b, y: torch_model_forward(x, w, b, y))

    # Inference path (y is None) -> logits
    logits = jax.block_until_ready(logits_fn(x, w, b))
    # Training path (y provided) -> scalar cross-entropy loss (single fused kernel)
    loss = jax.block_until_ready(loss_fn(x, w, b, y))

    # Pure-JAX reference (loose tolerance to absorb matmul-precision differences).
    ref_logits = jnp.sum(x[:, :, None] * w[None, :, :], axis=1) + b
    ref_z = ref_logits - jnp.max(ref_logits, axis=-1, keepdims=True)
    ref_lse = jnp.log(jnp.sum(jnp.exp(ref_z), axis=-1, keepdims=True))
    ref_loss = jnp.mean(ref_lse[:, 0] - ref_z[jnp.arange(batch), y])

    assert logits.shape == (batch, NUM_CLASSES)
    assert loss.shape == ()
    assert bool(jnp.all(jnp.isfinite(logits))) and bool(jnp.isfinite(loss))
    assert bool(jnp.allclose(logits, ref_logits, atol=5e-3, rtol=5e-3))
    assert bool(jnp.allclose(loss, ref_loss, atol=5e-3, rtol=5e-3))
    print("KERNEL_OK")
</pallas_src>

<mosaic_0001>
module attributes {stable_mosaic.version = 11 : i64} {
  func.func @_linear_kernel(%arg0: i32, %arg1: memref<8x32xf32, #tpu.memory_space<vmem>>, %arg2: memref<32x128xf32, #tpu.memory_space<vmem>>, %arg3: memref<1x128xf32, #tpu.memory_space<vmem>>, %arg4: memref<8x128xf32, #tpu.memory_space<vmem>>) attributes {dimension_semantics = [#tpu.dimension_semantics<parallel>], iteration_bounds = array<i64: 1>, scalar_prefetch = 0 : i64, scratch_operands = 0 : i64, tpu.core_type = #tpu.core_type<tc>, window_params = [{transform_indices = @transform_0, window_bounds = array<i64: 8, 32>}, {pipeline_mode = #tpu.pipeline_mode<synchronous>, transform_indices = @transform_1, window_bounds = array<i64: 32, 128>}, {pipeline_mode = #tpu.pipeline_mode<synchronous>, transform_indices = @transform_2, window_bounds = array<i64: 1, 128>}, {transform_indices = @transform_3, window_bounds = array<i64: 8, 128>}]} {
    %c0 = arith.constant 0 : index
    %c0_0 = arith.constant 0 : index
    %0 = vector.load %arg1[%c0, %c0_0] : memref<8x32xf32, #tpu.memory_space<vmem>>, vector<8x32xf32>
    %c0_1 = arith.constant 0 : index
    %c0_2 = arith.constant 0 : index
    %1 = vector.load %arg2[%c0_1, %c0_2] : memref<32x128xf32, #tpu.memory_space<vmem>>, vector<32x128xf32>
    %cst = arith.constant dense<0.000000e+00> : vector<8x128xf32>
    %2 = tpu.matmul %0, %1, %cst {dimension_numbers = #tpu.dot_dimension_numbers<[1], [0], [0], [1], [0, 0, 1, 1], [], []>} : vector<8x32xf32>, vector<32x128xf32>, vector<8x128xf32> -> vector<8x128xf32>
    %c0_3 = arith.constant 0 : index
    %c0_4 = arith.constant 0 : index
    %3 = vector.load %arg3[%c0_3, %c0_4] : memref<1x128xf32, #tpu.memory_space<vmem>>, vector<1x128xf32>
    %4 = vector.broadcast %3 : vector<1x128xf32> to vector<8x128xf32>
    %5 = arith.addf %2, %4 : vector<8x128xf32>
    %c0_5 = arith.constant 0 : index
    %c0_6 = arith.constant 0 : index
    %6 = vector.load %arg4[%c0_5, %c0_6] : memref<8x128xf32, #tpu.memory_space<vmem>>, vector<8x128xf32>
    tpu.vector_store %arg4[%c0_5, %c0_6], %5 {strides = array<i32>} : memref<8x128xf32, #tpu.memory_space<vmem>>, vector<8x128xf32>,
    return
  }
  func.func @transform_0(%arg0: i32) -> (i32, i32) {
    %c0_i32 = arith.constant 0 : i32
    %c0_i32_0 = arith.constant 0 : i32
    return %arg0, %c0_i32 : i32, i32
  }
  func.func @transform_1(%arg0: i32) -> (i32, i32) {
    %c0_i32 = arith.constant 0 : i32
    %c0_i32_0 = arith.constant 0 : i32
    %c0_i32_1 = arith.constant 0 : i32
    return %c0_i32, %c0_i32_0 : i32, i32
  }
  func.func @transform_2(%arg0: i32) -> (i32, i32) {
    %c0_i32 = arith.constant 0 : i32
    %c0_i32_0 = arith.constant 0 : i32
    %c0_i32_1 = arith.constant 0 : i32
    return %c0_i32, %c0_i32_0 : i32, i32
  }
  func.func @transform_3(%arg0: i32) -> (i32, i32) {
    %c0_i32 = arith.constant 0 : i32
    %c0_i32_0 = arith.constant 0 : i32
    return %arg0, %c0_i32 : i32, i32
  }
}

</mosaic_0001>

<llo_original>
// kernel: _lambda_.1
$region0: #{_lambda_.1}
  #allocation0 [shape = 'u32[]', space=smem, size = 0x4, offset = 0x4, fixed_abs, tag = 'smem constant byte address 0x4 - core index']
  #allocation1 [shape = 'u32[144,128]{1,0:T(1,128)}', space=vmem, size = 0x12000, scoped, tag = 'internal scratch']
  %s0 = inlined_call_operand.vmem [shape: f32[8,32], index: 0, kind: input, shape index: {}]
  %s1 = inlined_call_operand.vmem [shape: f32[32,128], index: 1, kind: input, shape index: {}]
  %s2 = inlined_call_operand.vmem [shape: f32[1,128], index: 2, kind: input, shape index: {}]
  %s3 = inlined_call_operand.hbm [shape: f32[8,128], index: 3, kind: output, shape index: {}]
  %s4 = sld [smem:[#allocation0]]
  $region22: #{_lambda_.1} parent=0
    _
  %s6 = ssub.s32 1, %s4
  %s7 = scalar_select 0, %s6, %s4
  $region1: #{_lambda_.1} parent=0
    #allocation2 [shape = 'u8[4096]{0}', space=vmem, size = 0x1000, scoped, tag = 'output window, operand 0, single buffered']
    #allocation3 [shape = 's32[1]{0}', space=sflag, size = 0x4, scoped, tag = 'scoped memory for _lambda_.1']
    %8 = vsyncpa [#allocation3], 0
    // Predicated region
    $region2: #{_lambda_.1} parent=1 // pred_check
      _
    $region3: #{_lambda_.1} parent=1 // pred_check_branch
      %10 = sbr.rel (0) target = $region5
    $region4: #{_lambda_.1} parent=1 // pred_region
      _
    $region5: #{_lambda_.1} parent=1 // pred_fallthru
      _
    // Predicated region
    $region6: #{_lambda_.1} parent=1 // pred_check
      _
    $region7: #{_lambda_.1} parent=1 // pred_check_branch
      %12 = sbr.rel (0) target = $region9
    $region8: #{_lambda_.1} parent=1 // pred_region
      _
    $region9: #{_lambda_.1} parent=1 // pred_fallthru
      _
    // Predicated region
    $region10: #{_lambda_.1} parent=1 // pred_check
      _
    $region11: #{_lambda_.1} parent=1 // pred_check_branch
      %14 = sbr.rel (0) target = $region13
    $region12: #{_lambda_.1} parent=1 // pred_region
      _
    $region13: #{_lambda_.1} parent=1 // pred_fallthru
      _
    %v15 = vld [vmem:[%s0] sm:$0xff]
    %v16 = vld [vmem:[%s1] sm:$0xff]
    %v17 = vld [vmem:[%s1 + $0x8] sm:$0xff]
    %v18 = vld [vmem:[%s1 + $0x10] sm:$0xff]
    %v19 = vld [vmem:[%s1 + $0x18] sm:$0xff]
    %v20 = vld [vmem:[%s2] sm:$0x1]
    %v22 = vlaneseq
    %v23 = vshrl.u32 %v22, 7
    %v24 = vsub.s32 0, %v23
    %v25 = vrot.slane %v20, %v24
    %vm27 = vcmask 261120
    %v29 = vsel %vm27, %v15, 0
    %31 = vmatprep.subr.mxu0 0.0
    %32 = vmatpush1.msra.mxu0 %v16
    %33 = vmatprep.subr.mxu0 0.0
    %34 = vmatpush1.msra.mxu0 %v17
    %35 = vmatprep.subr.mxu0 0.0
    %36 = vmatpush1.msra.mxu0 %v18
    %37 = vmatprep.subr.mxu0 0.0
    %38 = vmatpush1.msra.mxu0 %v19
    %39 = vmatprep.subr.mxu0 0.0
    %40 = vmatpush1.msra.mxu0 0.0
    %41 = vmatprep.subr.mxu0 0.0
    %42 = vmatpush1.msra.mxu0 0.0
    %43 = vmatprep.subr.mxu0 0.0
    %44 = vmatpush1.msra.mxu0 0.0
    %45 = vmatprep.subr.mxu0 0.0
    %46 = vmatpush1.msra.mxu0 0.0
    %47 = vmatprep.subr.mxu0 0.0
    %48 = vmatpush1.msra.mxu0 0.0
    %49 = vmatprep.subr.mxu0 0.0
    %50 = vmatpush1.msra.mxu0 0.0
    %51 = vmatprep.subr.mxu0 0.0
    %52 = vmatpush1.msra.mxu0 0.0
    %53 = vmatprep.subr.mxu0 0.0
    %54 = vmatpush1.msra.mxu0 0.0
    %55 = vmatprep.subr.mxu0 0.0
    %56 = vmatpush1.msra.mxu0 0.0
    %57 = vmatprep.subr.mxu0 0.0
    %58 = vmatpush1.msra.mxu0 0.0
    %59 = vmatprep.subr.mxu0 0.0
    %60 = vmatpush1.msra.mxu0 0.0
    %61 = vmatprep.subr.mxu0 0.0
    %62 = vmatpush1.msra.mxu0 0.0
    %63 = vmatprep.subr.mxu0 0.0
    %64 = vmatpush1.msra.mxu0 0.0
    %65 = vmatprep.subr.mxu0 0.0
    %66 = vmatpush1.msra.mxu0 0.0
    %67 = vmatprep.subr.mxu0 0.0
    %68 = vmatpush1.msra.mxu0 0.0
    %69 = vmatprep.subr.mxu0 0.0
    %70 = vmatpush1.msra.mxu0 0.0
    %71 = vmatprep.subr.mxu0 0.0
    %72 = vmatpush1.msra.mxu0 0.0
    %73 = vmatprep.subr.mxu0 0.0
    %74 = vmatpush1.msra.mxu0 0.0
    %75 = vmatprep.subr.mxu0 0.0
    %76 = vmatpush1.msra.mxu0 0.0
    %77 = vmatprep.subr.mxu0 0.0
    %78 = vmatpush1.msra.mxu0 0.0
    %79 = vmatprep.subr.mxu0 0.0
    %80 = vmatpush1.msra.mxu0 0.0
    %81 = vmatprep.subr.mxu0 0.0
    %82 = vmatpush1.msra.mxu0 0.0
    %83 = vmatprep.subr.mxu0 0.0
    %84 = vmatpush1.msra.mxu0 0.0
    %85 = vmatprep.subr.mxu0 0.0
    %86 = vmatpush1.msra.mxu0 0.0
    %87 = vmatprep.subr.mxu0 0.0
    %88 = vmatpush1.msra.mxu0 0.0
    %89 = vmatprep.subr.mxu0 0.0
    %90 = vmatpush1.msra.mxu0 0.0
    %91 = vmatprep.subr.mxu0 0.0
    %92 = vmatpush1.msra.mxu0 0.0
    %93 = vmatprep.subr.mxu0 0.0
    %94 = vmatpush1.msra.mxu0 0.0
    %95 = vmatprep.mubr.f32.mxu0 0.0
    %96 = vmatmul.mubr.f32.gmra.mrb[0].mxu0 %v29
    %v97 = vpop.f32.mrb[0].mxu0
    %v98 = vadd.f32 %v25, %v97
    %v99 = vpop.f32.mrb[0].mxu0
    %100 = vdwg.mxu0
    %101 = vst [vmem:[#allocation2] sm:$0xff] %v98
    // Predicated region
    $region14: #{_lambda_.1} parent=1 // pred_check
      _
    $region15: #{_lambda_.1} parent=1 // pred_check_branch
      %103 = sbr.rel (0) target = $region17
    $region16: #{_lambda_.1} parent=1 // pred_region
      %s105 = ssub.s32 128, 128
      %106 = vsyncadd [#allocation3], %s105
      %s108 = sshll.u32 [#allocation2], 4
      %s109 = int_to_ptr.vmem [resolvable:$true] %s108
      %111 = dma.vmem_to_hbm [thread:$0]  %s109, 128, %s3, [#allocation3]
    $region17: #{_lambda_.1} parent=1 // pred_fallthru
      _
    // Predicated region
    $region18: #{_lambda_.1} parent=1 // pred_check
      _
    $region19: #{_lambda_.1} parent=1 // pred_check_branch
      %113 = sbr.rel (0) target = $region21
    $region20: #{_lambda_.1} parent=1 // pred_region
      %114 = dma.done [#allocation3], 128
    $region21: #{_lambda_.1} parent=1 // pred_fallthru
      _
    %115 = vsyncpa [#allocation3], 1

</llo_original>
